<compile_context>
chip_gen: v6e
topology: v6e:2x2x1
jax: 0.10.0
libtpu: 0.0.40
codegen_flags: <defaults>
</compile_context>

<pallas_src>
import functools

import jax
import jax.numpy as jnp
from jax.experimental import pallas as pl
from jax.experimental.pallas import tpu as pltpu


def _cdiv(a, b):
    return (a + b - 1) // b


def _round_up(x, m):
    return _cdiv(x, m) * m


def _accum_kernel(compute_corr, p_ref, t_ref, colsq_ref, *corr_refs):
    """Streams lane-packed (tile_rows, W) blocks; accumulates column statistics."""
    if compute_corr:
        sum_t_ref, sum_p_ref, gram_t_ref, gram_p_ref = corr_refs

    @pl.when(pl.program_id(1) == 0)
    def _init():
        colsq_ref[...] = jnp.zeros_like(colsq_ref)
        if compute_corr:
            sum_t_ref[...] = jnp.zeros_like(sum_t_ref)
            sum_p_ref[...] = jnp.zeros_like(sum_p_ref)
            gram_t_ref[...] = jnp.zeros_like(gram_t_ref)
            gram_p_ref[...] = jnp.zeros_like(gram_p_ref)

    p = jnp.clip(p_ref[...], -10.0, 10.0)
    t = jnp.clip(t_ref[...], -10.0, 10.0)
    tm, w = p.shape  # static block shape

    d = p - t
    # Sublane-shaped accumulation: reduce (tm, W) -> (1, 8, W) with pure vreg
    # adds (leading-axis sum of a (tm//8, 8, W) view); the final cross-sublane
    # fold happens once in the wrapper finalize, not per tile.
    colsq_ref[...] += jnp.sum((d * d).reshape(tm // 8, 8, w),
                              axis=0, keepdims=True)

    if compute_corr:
        sum_t_ref[...] += jnp.sum(t.reshape(tm // 8, 8, w), axis=0, keepdims=True)
        sum_p_ref[...] += jnp.sum(p.reshape(tm // 8, 8, w), axis=0, keepdims=True)
        # Two separate packed grams (no concat copy, no unused cross block).
        # TODO(synk): verify via bundle dump that the K-contracted dot_general
        # does not insert a per-tile XLU transpose of the (tm, W) operand; if
        # it does, restructure per the perf review (pl.dot trans_a path).
        dn = (((0,), (0,)), ((), ()))
        gram_t_ref[...] += jax.lax.dot_general(
            t, t, dn, preferred_element_type=jnp.float32)[None]
        gram_p_ref[...] += jax.lax.dot_general(
            p, p, dn, preferred_element_type=jnp.float32)[None]


def custom_vae_loss(predictions, targets, fc_var_weight=None, epoch=None,
                    alpha=0.5, beta=0.1, has_model=True,
                    tile_rows=2048, num_splits=2):
    """JAX/Pallas equivalent of CustomVAELoss(base_loss='mse', alpha, beta).forward."""
    predictions = predictions.astype(jnp.float32)
    targets = targets.astype(jnp.float32)
    n, f = predictions.shape

    compute_corr = bool(has_model)  # model=None => corr_loss contributes 0
    # Matches PyTorch's `if epoch and epoch % 10 == 0` (needs a model for
    # model.cvae.fc_var.weight; skips epoch None / 0).
    use_reg = (bool(epoch) and (epoch % 10 == 0) and has_model
               and fc_var_weight is not None)

    # --- lane packing: (N, F) -> (N/L, W) with W = L*F (W == 128 when F | 128).
    l = max(1, 128 // f) if f < 128 else 1
    w = l * f

    # --- tile sizing: big enough to amortize per-grid-step overhead, small
    # enough that 2 inputs x 2 pipeline buffers stay within ~16 MiB of VMEM
    # (portable across v5e/v6e 128 MiB and v7x 64 MiB).
    input_budget = 16 * 1024 * 1024
    rows_cap = max(8, (input_budget // (2 * 2 * 4 * w)) // 8 * 8)
    n_packed = _cdiv(n, l)
    tile_rows = int(min(int(tile_rows), rows_cap,
                        _round_up(_cdiv(n_packed, num_splits), 8)))
    tile_rows = max(8, (tile_rows // 8) * 8)
    if tile_rows >= 128:
        tile_rows = (tile_rows // 128) * 128  # whole MXU K passes (v5e)

    tiles_per_split = _cdiv(n_packed, num_splits * tile_rows)
    n_packed_pad = num_splits * tiles_per_split * tile_rows
    n_pad = n_packed_pad * l
    if n_pad != n:
        pad = ((0, n_pad - n), (0, 0))
        predictions = jnp.pad(predictions, pad)
        targets = jnp.pad(targets, pad)
    p_packed = predictions.reshape(n_packed_pad, w)
    t_packed = targets.reshape(n_packed_pad, w)

    s = int(num_splits)
    tps = tiles_per_split

    out_shapes = [jax.ShapeDtypeStruct((s, 8, w), jnp.float32)]        # colsq
    out_specs = [pl.BlockSpec((1, 8, w), lambda c, i: (c, 0, 0))]
    if compute_corr:
        out_shapes += [jax.ShapeDtypeStruct((s, 8, w), jnp.float32),   # sum_t
                       jax.ShapeDtypeStruct((s, 8, w), jnp.float32),   # sum_p
                       jax.ShapeDtypeStruct((s, w, w), jnp.float32),   # gram_t
                       jax.ShapeDtypeStruct((s, w, w), jnp.float32)]   # gram_p
        out_specs += [pl.BlockSpec((1, 8, w), lambda c, i: (c, 0, 0)),
                      pl.BlockSpec((1, 8, w), lambda c, i: (c, 0, 0)),
                      pl.BlockSpec((1, w, w), lambda c, i: (c, 0, 0)),
                      pl.BlockSpec((1, w, w), lambda c, i: (c, 0, 0))]

    in_spec = pl.BlockSpec((tile_rows, w), lambda c, i: (c * tps + i, 0))

    outs = pl.pallas_call(
        functools.partial(_accum_kernel, compute_corr),
        out_shape=tuple(out_shapes),
        grid_spec=pltpu.PrefetchScalarGridSpec(
            num_scalar_prefetch=0,
            grid=(s, tps),
            in_specs=[in_spec, in_spec],
            out_specs=out_specs),
        compiler_params=pltpu.CompilerParams(
            dimension_semantics=("parallel", "arbitrary"),
            vmem_limit_bytes=48 * 1024 * 1024),
    )(p_packed, t_packed)

    # ---------------- finalize (tiny, data-independent of N; plain JAX) -------
    def _fold_vec(parts):  # (S, 8, W) partials -> (F,) per-feature sums
        return parts.sum(axis=(0, 1)).reshape(l, f).sum(axis=0)

    def _fold_gram(parts):  # (S, W, W) packed grams -> (F, F) feature gram
        g = parts.sum(axis=0).reshape(l, f, l, f)
        return jnp.einsum('afag->fg', g)  # sum of the L diagonal FxF blocks

    colsq_f = _fold_vec(outs[0])                                   # (F,)
    inv_nf = 1.0 / float(n * f)
    fw = jnp.linspace(1.0, 1.5, f, dtype=jnp.float32)              # torch.linspace
    base_loss = colsq_f.sum() * inv_nf
    weighted_loss = (fw * colsq_f).sum() * inv_nf
    total = base_loss + alpha * weighted_loss

    if compute_corr:
        sum_t_f = _fold_vec(outs[1])
        sum_p_f = _fold_vec(outs[2])
        gram_t = _fold_gram(outs[3])
        gram_p = _fold_gram(outs[4])

        def _corr(gram, ssum):
            cov = gram - jnp.outer(ssum, ssum) / float(n)
            var = jnp.diag(cov)
            # torch.corrcoef clips to [-1, 1]; 0-variance -> NaN matches torch.
            return jnp.clip(cov * jax.lax.rsqrt(jnp.outer(var, var)), -1.0, 1.0)

        corr_t = _corr(gram_t, sum_t_f)
        corr_p = _corr(gram_p, sum_p_f)
        total = total + beta * jnp.mean((corr_t - corr_p) ** 2)

    if use_reg:
        total = total + 0.3 * jnp.mean(fc_var_weight.astype(jnp.float32) ** 2)

    return total


def _reference_loss(p, t, w, epoch, alpha=0.5, beta=0.1, has_model=True):
    """Pure-JAX reference mirroring the PyTorch forward."""
    p = jnp.clip(p.astype(jnp.float32), -10.0, 10.0)
    t = jnp.clip(t.astype(jnp.float32), -10.0, 10.0)
    base = jnp.mean((p - t) ** 2)
    fw = jnp.linspace(1.0, 1.5, p.shape[1], dtype=jnp.float32)
    weighted = jnp.mean(fw * (p - t) ** 2)
    if has_model:
        corr_t = jnp.clip(jnp.corrcoef(t.T), -1.0, 1.0)
        corr_p = jnp.clip(jnp.corrcoef(p.T), -1.0, 1.0)
        corr_loss = jnp.mean((corr_t - corr_p) ** 2)
    else:
        corr_loss = 0.0
    total = base + alpha * weighted + beta * corr_loss
    if epoch and epoch % 10 == 0 and has_model:
        total = total + 0.3 * jnp.mean(w.astype(jnp.float32) ** 2)
    return total


if __name__ == "__main__":
    key = jax.random.PRNGKey(0)
    k1, k2, k3, k4, k5 = jax.random.split(key, 5)

    N, F = 64, 8                 # (batch, features)
    LATENT, HIDDEN = 8, 32       # synthetic model.cvae.fc_var.weight shape

    predictions = jax.random.normal(k1, (N, F), dtype=jnp.float32) * 3.0
    targets = jax.random.normal(k2, (N, F), dtype=jnp.float32) * 3.0
    fc_var_weight = jax.random.normal(k3, (LATENT, HIDDEN), dtype=jnp.float32) * 0.1

    # Case 1: model present, epoch % 10 == 0 regularizer path, default tiling.
    loss = custom_vae_loss(predictions, targets, fc_var_weight=fc_var_weight,
                           epoch=10, alpha=0.5, beta=0.1, has_model=True)
    loss = jax.block_until_ready(loss)
    ref = jax.block_until_ready(
        _reference_loss(predictions, targets, fc_var_weight, 10))
    assert jnp.allclose(loss, ref, rtol=1e-4, atol=1e-4), (loss, ref)

    # Case 2: N not a multiple of the packed tile (exercises zero-row padding
    # AND a multi-step reduction grid per split), no epoch regularizer.
    p2 = jax.random.normal(k4, (300, F), dtype=jnp.float32) * 3.0
    t2 = jax.random.normal(k5, (300, F), dtype=jnp.float32) * 3.0
    loss2 = jax.block_until_ready(
        custom_vae_loss(p2, t2, fc_var_weight=fc_var_weight, epoch=3,
                        alpha=0.5, beta=0.1, has_model=True,
                        tile_rows=8, num_splits=2))
    ref2 = jax.block_until_ready(_reference_loss(p2, t2, fc_var_weight, 3))
    assert jnp.allclose(loss2, ref2, rtol=1e-4, atol=1e-4), (loss2, ref2)

    # Case 3: model=None path (no correlation term, no regularizer).
    loss3 = jax.block_until_ready(
        custom_vae_loss(predictions, targets, fc_var_weight=None, epoch=10,
                        alpha=0.5, beta=0.1, has_model=False))
    ref3 = jax.block_until_ready(
        _reference_loss(predictions, targets, fc_var_weight, 10, has_model=False))
    assert jnp.allclose(loss3, ref3, rtol=1e-4, atol=1e-4), (loss3, ref3)

    print("KERNEL_OK")
</pallas_src>

<mosaic_0001>
module attributes {stable_mosaic.version = 11 : i64} {
  func.func @_accum_kernel(%arg0: i32, %arg1: i32, %arg2: memref<8x128xf32, #tpu.memory_space<vmem>>, %arg3: memref<8x128xf32, #tpu.memory_space<vmem>>, %arg4: memref<1x8x128xf32, #tpu.memory_space<vmem>>, %arg5: memref<1x8x128xf32, #tpu.memory_space<vmem>>, %arg6: memref<1x8x128xf32, #tpu.memory_space<vmem>>, %arg7: memref<1x128x128xf32, #tpu.memory_space<vmem>>, %arg8: memref<1x128x128xf32, #tpu.memory_space<vmem>>) attributes {dimension_semantics = [#tpu.dimension_semantics<parallel>, #tpu.dimension_semantics<arbitrary>], iteration_bounds = array<i64: 2, 1>, scalar_prefetch = 0 : i64, scratch_operands = 0 : i64, tpu.core_type = #tpu.core_type<tc>, window_params = [{transform_indices = @transform_0, window_bounds = array<i64: 8, 128>}, {transform_indices = @transform_1, window_bounds = array<i64: 8, 128>}, {transform_indices = @transform_2, window_bounds = array<i64: 1, 8, 128>}, {transform_indices = @transform_3, window_bounds = array<i64: 1, 8, 128>}, {transform_indices = @transform_4, window_bounds = array<i64: 1, 8, 128>}, {transform_indices = @transform_5, window_bounds = array<i64: 1, 128, 128>}, {transform_indices = @transform_6, window_bounds = array<i64: 1, 128, 128>}]} {
    %c0_i32 = arith.constant 0 : i32
    %0 = arith.cmpi eq, %arg1, %c0_i32 : i32
    %1 = arith.extui %0 : i1 to i32
    %c0_i32_0 = arith.constant 0 : i32
    %2 = arith.cmpi ne, %1, %c0_i32_0 : i32
    scf.if %2 {
      %cst_42 = arith.constant 0.000000e+00 : f32
      %43 = vector.broadcast %cst_42 : f32 to vector<1x8x128xf32>
      %c0_43 = arith.constant 0 : index
      %c0_44 = arith.constant 0 : index
      %c0_45 = arith.constant 0 : index
      %44 = vector.load %arg4[%c0_43, %c0_44, %c0_45] : memref<1x8x128xf32, #tpu.memory_space<vmem>>, vector<1x8x128xf32>
      tpu.vector_store %arg4[%c0_43, %c0_44, %c0_45], %43 {strides = array<i32>} : memref<1x8x128xf32, #tpu.memory_space<vmem>>, vector<1x8x128xf32>,
      %cst_46 = arith.constant 0.000000e+00 : f32
      %45 = vector.broadcast %cst_46 : f32 to vector<1x8x128xf32>
      %c0_47 = arith.constant 0 : index
      %c0_48 = arith.constant 0 : index
      %c0_49 = arith.constant 0 : index
      %46 = vector.load %arg5[%c0_47, %c0_48, %c0_49] : memref<1x8x128xf32, #tpu.memory_space<vmem>>, vector<1x8x128xf32>
      tpu.vector_store %arg5[%c0_47, %c0_48, %c0_49], %45 {strides = array<i32>} : memref<1x8x128xf32, #tpu.memory_space<vmem>>, vector<1x8x128xf32>,
      %cst_50 = arith.constant 0.000000e+00 : f32
      %47 = vector.broadcast %cst_50 : f32 to vector<1x8x128xf32>
      %c0_51 = arith.constant 0 : index
      %c0_52 = arith.constant 0 : index
      %c0_53 = arith.constant 0 : index
      %48 = vector.load %arg6[%c0_51, %c0_52, %c0_53] : memref<1x8x128xf32, #tpu.memory_space<vmem>>, vector<1x8x128xf32>
      tpu.vector_store %arg6[%c0_51, %c0_52, %c0_53], %47 {strides = array<i32>} : memref<1x8x128xf32, #tpu.memory_space<vmem>>, vector<1x8x128xf32>,
      %cst_54 = arith.constant 0.000000e+00 : f32
      %49 = vector.broadcast %cst_54 : f32 to vector<1x128x128xf32>
      %c0_55 = arith.constant 0 : index
      %c0_56 = arith.constant 0 : index
      %c0_57 = arith.constant 0 : index
      %50 = vector.load %arg7[%c0_55, %c0_56, %c0_57] : memref<1x128x128xf32, #tpu.memory_space<vmem>>, vector<1x128x128xf32>
      tpu.vector_store %arg7[%c0_55, %c0_56, %c0_57], %49 {strides = array<i32>} : memref<1x128x128xf32, #tpu.memory_space<vmem>>, vector<1x128x128xf32>,
      %cst_58 = arith.constant 0.000000e+00 : f32
      %51 = vector.broadcast %cst_58 : f32 to vector<1x128x128xf32>
      %c0_59 = arith.constant 0 : index
      %c0_60 = arith.constant 0 : index
      %c0_61 = arith.constant 0 : index
      %52 = vector.load %arg8[%c0_59, %c0_60, %c0_61] : memref<1x128x128xf32, #tpu.memory_space<vmem>>, vector<1x128x128xf32>
      tpu.vector_store %arg8[%c0_59, %c0_60, %c0_61], %51 {strides = array<i32>} : memref<1x128x128xf32, #tpu.memory_space<vmem>>, vector<1x128x128xf32>,
    } else {
    }
    %c0 = arith.constant 0 : index
    %c0_1 = arith.constant 0 : index
    %3 = vector.load %arg2[%c0, %c0_1] : memref<8x128xf32, #tpu.memory_space<vmem>>, vector<8x128xf32>
    %cst = arith.constant -1.000000e+01 : f32
    %cst_2 = arith.constant 1.000000e+01 : f32
    %4 = vector.broadcast %cst : f32 to vector<8x128xf32>
    %5 = arith.maximumf %4, %3 : vector<8x128xf32>
    %6 = vector.broadcast %cst_2 : f32 to vector<8x128xf32>
    %7 = arith.minimumf %6, %5 : vector<8x128xf32>
    %c0_3 = arith.constant 0 : index
    %c0_4 = arith.constant 0 : index
    %8 = vector.load %arg3[%c0_3, %c0_4] : memref<8x128xf32, #tpu.memory_space<vmem>>, vector<8x128xf32>
    %cst_5 = arith.constant -1.000000e+01 : f32
    %cst_6 = arith.constant 1.000000e+01 : f32
    %9 = vector.broadcast %cst_5 : f32 to vector<8x128xf32>
    %10 = arith.maximumf %9, %8 : vector<8x128xf32>
    %11 = vector.broadcast %cst_6 : f32 to vector<8x128xf32>
    %12 = arith.minimumf %11, %10 : vector<8x128xf32>
    %13 = arith.subf %7, %12 : vector<8x128xf32>
    %c0_7 = arith.constant 0 : index
    %c0_8 = arith.constant 0 : index
    %c0_9 = arith.constant 0 : index
    %14 = vector.load %arg4[%c0_7, %c0_8, %c0_9] : memref<1x8x128xf32, #tpu.memory_space<vmem>>, vector<1x8x128xf32>
    %15 = arith.mulf %13, %13 : vector<8x128xf32>
    %16 = vector.shape_cast %15 : vector<8x128xf32> to vector<1x8x128xf32>
    %cst_10 = arith.constant dense<0.000000e+00> : vector<8x128xf32>
    %17 = vector.multi_reduction <add>, %16, %cst_10 [0] : vector<1x8x128xf32> to vector<8x128xf32>
    %18 = vector.shape_cast %17 : vector<8x128xf32> to vector<1x8x128xf32>
    %19 = arith.addf %14, %18 : vector<1x8x128xf32>
    %c0_11 = arith.constant 0 : index
    %c0_12 = arith.constant 0 : index
    %c0_13 = arith.constant 0 : index
    %20 = vector.load %arg4[%c0_11, %c0_12, %c0_13] : memref<1x8x128xf32, #tpu.memory_space<vmem>>, vector<1x8x128xf32>
    tpu.vector_store %arg4[%c0_11, %c0_12, %c0_13], %19 {strides = array<i32>} : memref<1x8x128xf32, #tpu.memory_space<vmem>>, vector<1x8x128xf32>,
    %c0_14 = arith.constant 0 : index
    %c0_15 = arith.constant 0 : index
    %c0_16 = arith.constant 0 : index
    %21 = vector.load %arg5[%c0_14, %c0_15, %c0_16] : memref<1x8x128xf32, #tpu.memory_space<vmem>>, vector<1x8x128xf32>
    %22 = vector.shape_cast %12 : vector<8x128xf32> to vector<1x8x128xf32>
    %cst_17 = arith.constant dense<0.000000e+00> : vector<8x128xf32>
    %23 = vector.multi_reduction <add>, %22, %cst_17 [0] : vector<1x8x128xf32> to vector<8x128xf32>
    %24 = vector.shape_cast %23 : vector<8x128xf32> to vector<1x8x128xf32>
    %25 = arith.addf %21, %24 : vector<1x8x128xf32>
    %c0_18 = arith.constant 0 : index
    %c0_19 = arith.constant 0 : index
    %c0_20 = arith.constant 0 : index
    %26 = vector.load %arg5[%c0_18, %c0_19, %c0_20] : memref<1x8x128xf32, #tpu.memory_space<vmem>>, vector<1x8x128xf32>
    tpu.vector_store %arg5[%c0_18, %c0_19, %c0_20], %25 {strides = array<i32>} : memref<1x8x128xf32, #tpu.memory_space<vmem>>, vector<1x8x128xf32>,
    %c0_21 = arith.constant 0 : index
    %c0_22 = arith.constant 0 : index
    %c0_23 = arith.constant 0 : index
    %27 = vector.load %arg6[%c0_21, %c0_22, %c0_23] : memref<1x8x128xf32, #tpu.memory_space<vmem>>, vector<1x8x128xf32>
    %28 = vector.shape_cast %7 : vector<8x128xf32> to vector<1x8x128xf32>
    %cst_24 = arith.constant dense<0.000000e+00> : vector<8x128xf32>
    %29 = vector.multi_reduction <add>, %28, %cst_24 [0] : vector<1x8x128xf32> to vector<8x128xf32>
    %30 = vector.shape_cast %29 : vector<8x128xf32> to vector<1x8x128xf32>
    %31 = arith.addf %27, %30 : vector<1x8x128xf32>
    %c0_25 = arith.constant 0 : index
    %c0_26 = arith.constant 0 : index
    %c0_27 = arith.constant 0 : index
    %32 = vector.load %arg6[%c0_25, %c0_26, %c0_27] : memref<1x8x128xf32, #tpu.memory_space<vmem>>, vector<1x8x128xf32>
    tpu.vector_store %arg6[%c0_25, %c0_26, %c0_27], %31 {strides = array<i32>} : memref<1x8x128xf32, #tpu.memory_space<vmem>>, vector<1x8x128xf32>,
    %c0_28 = arith.constant 0 : index
    %c0_29 = arith.constant 0 : index
    %c0_30 = arith.constant 0 : index
    %33 = vector.load %arg7[%c0_28, %c0_29, %c0_30] : memref<1x128x128xf32, #tpu.memory_space<vmem>>, vector<1x128x128xf32>
    %cst_31 = arith.constant dense<0.000000e+00> : vector<128x128xf32>
    %34 = tpu.matmul %12, %12, %cst_31 {dimension_numbers = #tpu.dot_dimension_numbers<[0], [0], [1], [1], [0, 1, 1, 1], [], []>} : vector<8x128xf32>, vector<8x128xf32>, vector<128x128xf32> -> vector<128x128xf32>
    %35 = vector.shape_cast %34 : vector<128x128xf32> to vector<1x128x128xf32>
    %36 = arith.addf %33, %35 : vector<1x128x128xf32>
    %c0_32 = arith.constant 0 : index
    %c0_33 = arith.constant 0 : index
    %c0_34 = arith.constant 0 : index
    %37 = vector.load %arg7[%c0_32, %c0_33, %c0_34] : memref<1x128x128xf32, #tpu.memory_space<vmem>>, vector<1x128x128xf32>
    tpu.vector_store %arg7[%c0_32, %c0_33, %c0_34], %36 {strides = array<i32>} : memref<1x128x128xf32, #tpu.memory_space<vmem>>, vector<1x128x128xf32>,
    %c0_35 = arith.constant 0 : index
    %c0_36 = arith.constant 0 : index
    %c0_37 = arith.constant 0 : index
    %38 = vector.load %arg8[%c0_35, %c0_36, %c0_37] : memref<1x128x128xf32, #tpu.memory_space<vmem>>, vector<1x128x128xf32>
    %cst_38 = arith.constant dense<0.000000e+00> : vector<128x128xf32>
    %39 = tpu.matmul %7, %7, %cst_38 {dimension_numbers = #tpu.dot_dimension_numbers<[0], [0], [1], [1], [0, 1, 1, 1], [], []>} : vector<8x128xf32>, vector<8x128xf32>, vector<128x128xf32> -> vector<128x128xf32>
    %40 = vector.shape_cast %39 : vector<128x128xf32> to vector<1x128x128xf32>
    %41 = arith.addf %38, %40 : vector<1x128x128xf32>
    %c0_39 = arith.constant 0 : index
    %c0_40 = arith.constant 0 : index
    %c0_41 = arith.constant 0 : index
    %42 = vector.load %arg8[%c0_39, %c0_40, %c0_41] : memref<1x128x128xf32, #tpu.memory_space<vmem>>, vector<1x128x128xf32>
    tpu.vector_store %arg8[%c0_39, %c0_40, %c0_41], %41 {strides = array<i32>} : memref<1x128x128xf32, #tpu.memory_space<vmem>>, vector<1x128x128xf32>,
    return
  }
  func.func @transform_0(%arg0: i32, %arg1: i32) -> (i32, i32) {
    %c1_i32 = arith.constant 1 : i32
    %0 = arith.muli %arg0, %c1_i32 : i32
    %1 = arith.addi %0, %arg1 : i32
    %c0_i32 = arith.constant 0 : i32
    %c0_i32_0 = arith.constant 0 : i32
    return %1, %c0_i32 : i32, i32
  }
  func.func @transform_1(%arg0: i32, %arg1: i32) -> (i32, i32) {
    %c1_i32 = arith.constant 1 : i32
    %0 = arith.muli %arg0, %c1_i32 : i32
    %1 = arith.addi %0, %arg1 : i32
    %c0_i32 = arith.constant 0 : i32
    %c0_i32_0 = arith.constant 0 : i32
    return %1, %c0_i32 : i32, i32
  }
  func.func @transform_2(%arg0: i32, %arg1: i32) -> (i32, i32, i32) {
    %c0_i32 = arith.constant 0 : i32
    %c0_i32_0 = arith.constant 0 : i32
    %c0_i32_1 = arith.constant 0 : i32
    return %arg0, %c0_i32, %c0_i32_0 : i32, i32, i32
  }
  func.func @transform_3(%arg0: i32, %arg1: i32) -> (i32, i32, i32) {
    %c0_i32 = arith.constant 0 : i32
    %c0_i32_0 = arith.constant 0 : i32
    %c0_i32_1 = arith.constant 0 : i32
    return %arg0, %c0_i32, %c0_i32_0 : i32, i32, i32
  }
  func.func @transform_4(%arg0: i32, %arg1: i32) -> (i32, i32, i32) {
    %c0_i32 = arith.constant 0 : i32
    %c0_i32_0 = arith.constant 0 : i32
    %c0_i32_1 = arith.constant 0 : i32
    return %arg0, %c0_i32, %c0_i32_0 : i32, i32, i32
  }
  func.func @transform_5(%arg0: i32, %arg1: i32) -> (i32, i32, i32) {
    %c0_i32 = arith.constant 0 : i32
    %c0_i32_0 = arith.constant 0 : i32
    %c0_i32_1 = arith.constant 0 : i32
    return %arg0, %c0_i32, %c0_i32_0 : i32, i32, i32
  }
  func.func @transform_6(%arg0: i32, %arg1: i32) -> (i32, i32, i32) {
    %c0_i32 = arith.constant 0 : i32
    %c0_i32_0 = arith.constant 0 : i32
    %c0_i32_1 = arith.constant 0 : i32
    return %arg0, %c0_i32, %c0_i32_0 : i32, i32, i32
  }
}

</mosaic_0001>

<llo_original>
// kernel: tpu_custom_call.1
$region0: #{tpu_custom_call.1}
  #allocation0 [shape = 'u32[]', space=smem, size = 0x4, offset = 0x4, fixed_abs, tag = 'smem constant byte address 0x4 - core index']
  #allocation1 [shape = 'u32[144,128]{1,0:T(1,128)}', space=vmem, size = 0x12000, scoped, tag = 'internal scratch']
  %s0 = inlined_call_operand.hbm [shape: f32[16,128], index: 0, kind: input, shape index: {}]
  %s1 = inlined_call_operand.hbm [shape: f32[16,128], index: 1, kind: input, shape index: {}]
  %s2 = inlined_call_operand.hbm [shape: f32[2,8,128], index: 2, kind: output, shape index: {0}]
  %s3 = inlined_call_operand.hbm [shape: f32[2,8,128], index: 3, kind: output, shape index: {1}]
  %s4 = inlined_call_operand.hbm [shape: f32[2,8,128], index: 4, kind: output, shape index: {2}]
  %s5 = inlined_call_operand.hbm [shape: f32[2,128,128], index: 5, kind: output, shape index: {3}]
  %s6 = inlined_call_operand.hbm [shape: f32[2,128,128], index: 6, kind: output, shape index: {4}]
  %7 = xla_tuple %s2, %s3, %s4, %s5, %s6
  %s8 = sld [smem:[#allocation0]]
  $region85: #{tpu_custom_call.1} parent=0
    _
  %s10 = ssub.s32 1, %s8
  %s11 = scalar_select 0, %s10, %s8
  $region1: #{tpu_custom_call.1} parent=0
    #allocation2 [shape = 'u8[8192]{0}', space=vmem, size = 0x2000, scoped, tag = 'input window, operand 0']
    #allocation3 [shape = 's32[2]{0}', space=sflag, size = 0x8, scoped, tag = 'scoped memory for tpu_custom_call.1']
    #allocation4 [shape = 's32[2]{0}', space=sflag, size = 0x8, scoped, tag = 'scoped memory for tpu_custom_call.1']
    #allocation5 [shape = 'u8[8192]{0}', space=vmem, size = 0x2000, scoped, tag = 'input window, operand 1']
    #allocation6 [shape = 's32[2]{0}', space=sflag, size = 0x8, scoped, tag = 'scoped memory for tpu_custom_call.1']
    #allocation7 [shape = 'u8[8192]{0}', space=vmem, size = 0x2000, scoped, tag = 'output window, operand 0']
    #allocation8 [shape = 'u8[8192]{0}', space=vmem, size = 0x2000, scoped, tag = 'output window, operand 1']
    #allocation9 [shape = 's32[2]{0}', space=sflag, size = 0x8, scoped, tag = 'scoped memory for tpu_custom_call.1']
    #allocation10 [shape = 'u8[8192]{0}', space=vmem, size = 0x2000, scoped, tag = 'output window, operand 2']
    #allocation11 [shape = 'u8[131072]{0}', space=vmem, size = 0x20000, scoped, tag = 'output window, operand 3']
    #allocation12 [shape = 's32[2]{0}', space=sflag, size = 0x8, scoped, tag = 'scoped memory for tpu_custom_call.1']
    #allocation13 [shape = 'u8[131072]{0}', space=vmem, size = 0x20000, scoped, tag = 'output window, operand 4']
    %12 = vsyncpa [#allocation3], 0
    %s13 = scalar_lea.sflag [#allocation3], 1
    %14 = vsyncpa %s13, 0
    %15 = vsyncpa [#allocation6], 0
    %s16 = scalar_lea.sflag [#allocation6], 1
    %17 = vsyncpa %s16, 0
    %18 = vsyncpa [#allocation4], 0
    %s19 = scalar_lea.sflag [#allocation4], 1
    %20 = vsyncpa %s19, 0
    %21 = vsyncpa [#allocation9], 0
    %s22 = scalar_lea.sflag [#allocation9], 1
    %23 = vsyncpa %s22, 0
    %24 = vsyncpa [#allocation12], 0
    %s25 = scalar_lea.sflag [#allocation12], 1
    %26 = vsyncpa %s25, 0
    loop: start=0, step=1, limit=4
    $region2: #{tpu_custom_call.1} parent=1 // loop_pre_header
      _
    $region3: #{tpu_custom_call.1} parent=1 // loop_header
      %s28 = sphi 0, %s32
      %p29 = scmp.ge.s32.totalorder %s28, 4
      %s35 = sphi 0, %s47
      %s36 = sphi 0, %s43
      %s37 = sphi 0, %s35
      %s38 = sphi 0, %s36
      %s39 = sphi 0, %s37
      %s40 = sphi 0, %s38
      %s52 = sphi 0, %s54
      %s55 = sphi 0, %s52
      %s56 = sphi 0, %s55
      %s72 = sphi 0, %s56
      %s80 = sphi 0, %s82
      %s83 = sphi 0, %s80
      %s84 = sphi 0, %s83
      %s100 = sphi 0, %s84
      %s106 = sphi 0, %s108
      %s109 = sphi 0, %s106
      %s110 = sphi 0, %s109
      %s126 = sphi 0, %s110
      %s132 = sphi 0, %s134
      %s135 = sphi 0, %s132
      %s136 = sphi 0, %s135
      %s152 = sphi 0, %s136
      %s158 = sphi 0, %s160
      %s161 = sphi 0, %s158
      %s162 = sphi 0, %s161
      %s178 = sphi 0, %s162
      %s184 = sphi 0, %s186
      %s187 = sphi 0, %s184
      %s188 = sphi 0, %s187
      %s204 = sphi 0, %s188
      %s210 = sphi 0, %s212
      %s213 = sphi 0, %s210
      %s214 = sphi 0, %s213
      %s230 = sphi 0, %s214
    $region4: #{tpu_custom_call.1} parent=1 // loop_header_branch
      %31 = sbr.rel (%p29) target = $region8
    $region5: #{tpu_custom_call.1} parent=1 // loop_body
      %s33 = ssub.s32 %s28, 1
      %s34 = ssub.s32 %s28, 2
      %s41 = sadd.s32 1, %s36
      %p42 = scmp.ge.s32.totalorder %s41, 1
      %s43 = scalar_select %p42, 0, %s41
      %s44 = sadd.s32 1, %s35
      %s45 = scalar_select %p42, %s44, %s35
      %p46 = scmp.ge.s32.totalorder %s45, 2
      %s47 = scalar_select %p46, 0, %s45
      %s48 = sadd.s32 %s35, %s36
      %s49 = sadd.s32 %s47, %s43
      %s50 = ssub.s32 %s48, %s49
      %p51 = scmp.eq.s32.totalorder %s50, 0
      %s53 = sadd.s32 %s52, 1
      %s54 = scalar_select %p51, %s52, %s53
      %p57 = pneg %p51
      %p58 = scmp.eq.s32.totalorder %s28, 1
      %p59 = por %p57, %p58
      %p60 = scmp.ne.s32.totalorder %s52, %s55
      %p61 = scmp.eq.s32.totalorder %s28, 0
      %p62 = por %p60, %p61
      %p63 = scmp.ne.s32.totalorder %s52, %s55
      %p64 = scmp.eq.s32.totalorder %s33, 1
      %p65 = por %p63, %p64
      %p66 = scmp.ne.s32.totalorder %s55, %s56
      %p67 = scmp.eq.s32.totalorder %s33, 0
      %p68 = por %p66, %p67
      %p69 = scmp.ne.s32.totalorder %s55, %s56
      %p70 = scmp.eq.s32.totalorder %s34, 1
      %p71 = por %p69, %p70
      %p73 = scmp.ne.s32.totalorder %s56, %s72
      %p74 = scmp.eq.s32.totalorder %s34, 0
      %p75 = por %p73, %p74
      %s76 = sadd.s32 %s35, %s36
      %s77 = sadd.s32 %s47, %s43
      %s78 = ssub.s32 %s76, %s77
      %p79 = scmp.eq.s32.totalorder %s78, 0
      %s81 = sadd.s32 %s80, 1
      %s82 = scalar_select %p79, %s80, %s81
      %p85 = pneg %p79
      %p86 = scmp.eq.s32.totalorder %s28, 1
      %p87 = por %p85, %p86
      %p88 = scmp.ne.s32.totalorder %s80, %s83
      %p89 = scmp.eq.s32.totalorder %s28, 0
      %p90 = por %p88, %p89
      %p91 = scmp.ne.s32.totalorder %s80, %s83
      %p92 = scmp.eq.s32.totalorder %s33, 1
      %p93 = por %p91, %p92
      %p94 = scmp.ne.s32.totalorder %s83, %s84
      %p95 = scmp.eq.s32.totalorder %s33, 0
      %p96 = por %p94, %p95
      %p97 = scmp.ne.s32.totalorder %s83, %s84
      %p98 = scmp.eq.s32.totalorder %s34, 1
      %p99 = por %p97, %p98
      %p101 = scmp.ne.s32.totalorder %s84, %s100
      %p102 = scmp.eq.s32.totalorder %s34, 0
      %p103 = por %p101, %p102
      %s104 = ssub.s32 %s35, %s47
      %p105 = scmp.eq.s32.totalorder %s104, 0
      %s107 = sadd.s32 %s106, 1
      %s108 = scalar_select %p105, %s106, %s107
      %p111 = pneg %p105
      %p112 = scmp.eq.s32.totalorder %s28, 1
      %p113 = por %p111, %p112
      %p114 = scmp.ne.s32.totalorder %s106, %s109
      %p115 = scmp.eq.s32.totalorder %s28, 0
      %p116 = por %p114, %p115
      %p117 = scmp.ne.s32.totalorder %s106, %s109
      %p118 = scmp.eq.s32.totalorder %s33, 1
      %p119 = por %p117, %p118
      %p120 = scmp.ne.s32.totalorder %s109, %s110
      %p121 = scmp.eq.s32.totalorder %s33, 0
      %p122 = por %p120, %p121
      %p123 = scmp.ne.s32.totalorder %s109, %s110
      %p124 = scmp.eq.s32.totalorder %s34, 1
      %p125 = por %p123, %p124
      %p127 = scmp.ne.s32.totalorder %s110, %s126
      %p128 = scmp.eq.s32.totalorder %s34, 0
      %p129 = por %p127, %p128
      %s130 = ssub.s32 %s35, %s47
      %p131 = scmp.eq.s32.totalorder %s130, 0
      %s133 = sadd.s32 %s132, 1
      %s134 = scalar_select %p131, %s132, %s133
      %p137 = pneg %p131
      %p138 = scmp.eq.s32.totalorder %s28, 1
      %p139 = por %p137, %p138
      %p140 = scmp.ne.s32.totalorder %s132, %s135
      %p141 = scmp.eq.s32.totalorder %s28, 0
      %p142 = por %p140, %p141
      %p143 = scmp.ne.s32.totalorder %s132, %s135
      %p144 = scmp.eq.s32.totalorder %s33, 1
      %p145 = por %p143, %p144
      %p146 = scmp.ne.s32.totalorder %s135, %s136
      %p147 = scmp.eq.s32.totalorder %s33, 0
      %p148 = por %p146, %p147
      %p149 = scmp.ne.s32.totalorder %s135, %s136
      %p150 = scmp.eq.s32.totalorder %s34, 1
      %p151 = por %p149, %p150
      %p153 = scmp.ne.s32.totalorder %s136, %s152
      %p154 = scmp.eq.s32.totalorder %s34, 0
      %p155 = por %p153, %p154
      %s156 = ssub.s32 %s35, %s47
      %p157 = scmp.eq.s32.totalorder %s156, 0
      %s159 = sadd.s32 %s158, 1
      %s160 = scalar_select %p157, %s158, %s159
      %p163 = pneg %p157
      %p164 = scmp.eq.s32.totalorder %s28, 1
      %p165 = por %p163, %p164
      %p166 = scmp.ne.s32.totalorder %s158, %s161
      %p167 = scmp.eq.s32.totalorder %s28, 0
      %p168 = por %p166, %p167
      %p169 = scmp.ne.s32.totalorder %s158, %s161
      %p170 = scmp.eq.s32.totalorder %s33, 1
      %p171 = por %p169, %p170
      %p172 = scmp.ne.s32.totalorder %s161, %s162
      %p173 = scmp.eq.s32.totalorder %s33, 0
      %p174 = por %p172, %p173
      %p175 = scmp.ne.s32.totalorder %s161, %s162
      %p176 = scmp.eq.s32.totalorder %s34, 1
      %p177 = por %p175, %p176
      %p179 = scmp.ne.s32.totalorder %s162, %s178
      %p180 = scmp.eq.s32.totalorder %s34, 0
      %p181 = por %p179, %p180
      %s182 = ssub.s32 %s35, %s47
      %p183 = scmp.eq.s32.totalorder %s182, 0
      %s185 = sadd.s32 %s184, 1
      %s186 = scalar_select %p183, %s184, %s185
      %p189 = pneg %p183
      %p190 = scmp.eq.s32.totalorder %s28, 1
      %p191 = por %p189, %p190
      %p192 = scmp.ne.s32.totalorder %s184, %s187
      %p193 = scmp.eq.s32.totalorder %s28, 0
      %p194 = por %p192, %p193
      %p195 = scmp.ne.s32.totalorder %s184, %s187
      %p196 = scmp.eq.s32.totalorder %s33, 1
      %p197 = por %p195, %p196
      %p198 = scmp.ne.s32.totalorder %s187, %s188
      %p199 = scmp.eq.s32.totalorder %s33, 0
      %p200 = por %p198, %p199
      %p201 = scmp.ne.s32.totalorder %s187, %s188
      %p202 = scmp.eq.s32.totalorder %s34, 1
      %p203 = por %p201, %p202
      %p205 = scmp.ne.s32.totalorder %s188, %s204
      %p206 = scmp.eq.s32.totalorder %s34, 0
      %p207 = por %p205, %p206
      %s208 = ssub.s32 %s35, %s47
      %p209 = scmp.eq.s32.totalorder %s208, 0
      %s211 = sadd.s32 %s210, 1
      %s212 = scalar_select %p209, %s210, %s211
      %p215 = pneg %p209
      %p216 = scmp.eq.s32.totalorder %s28, 1
      %p217 = por %p215, %p216
      %p218 = scmp.ne.s32.totalorder %s210, %s213
      %p219 = scmp.eq.s32.totalorder %s28, 0
      %p220 = por %p218, %p219
      %p221 = scmp.ne.s32.totalorder %s210, %s213
      %p222 = scmp.eq.s32.totalorder %s33, 1
      %p223 = por %p221, %p222
      %p224 = scmp.ne.s32.totalorder %s213, %s214
      %p225 = scmp.eq.s32.totalorder %s33, 0
      %p226 = por %p224, %p225
      %p227 = scmp.ne.s32.totalorder %s213, %s214
      %p228 = scmp.eq.s32.totalorder %s34, 1
      %p229 = por %p227, %p228
      %p231 = scmp.ne.s32.totalorder %s214, %s230
      %p232 = scmp.eq.s32.totalorder %s34, 0
      %p233 = por %p231, %p232
      %p234 = scmp.le.s32.totalorder 1, %s28
      %p235 = scmp.lt.s32.totalorder %s28, 3
      %p236 = pnand %p234, %p235
      %p237 = pneg %p236
      // Predicated region
      $region9: #{tpu_custom_call.1} parent=5 // pred_check
        _
      $region10: #{tpu_custom_call.1} parent=5 // pred_check_branch
        %239 = sbr.rel (%p236) target = $region12
      $region11: #{tpu_custom_call.1} parent=5 // pred_region
        %s240 = ssub.s32 %s28, 1
      $region12: #{tpu_custom_call.1} parent=5 // pred_fallthru
        _
      %p241 = scmp.lt.s32.totalorder %s28, 2
      // Predicated region
      $region13: #{tpu_custom_call.1} parent=5 // pred_check
        %p242 = pneg %p241
      $region14: #{tpu_custom_call.1} parent=5 // pred_check_branch
        %244 = sbr.rel (%p242) target = $region16
      $region15: #{tpu_custom_call.1} parent=5 // pred_region
        // Predicated region
        $region17: #{tpu_custom_call.1} parent=15 // pred_check
          %p245 = pneg %p62
        $region18: #{tpu_custom_call.1} parent=15 // pred_check_branch
          %247 = sbr.rel (%p245) target = $region20
        $region19: #{tpu_custom_call.1} parent=15 // pred_region
          %s248 = sand.u32 %s52, 1
          %s249 = scalar_lea.sflag [#allocation3], %s248
          %s250 = sand.u32 %s52, 1
          %s251 = smul.addr %s250, 8
          %s252 = scalar_lea.vmem [#allocation2], %s251
          %s253 = sadd.s32 %s35, %s36
          %s255 = ssub.s32 128, 128
          %256 = vsyncadd %s249, %s255
          %s257 = smul.addr %s253, 128
          %s258 = scalar_lea.hbm %s0, %s257
          %s260 = sshll.u32 %s252, 4
          %s261 = int_to_ptr.vmem [resolvable:$true] %s260
          %263 = dma.hbm_to_vmem [thread:$0]  %s258, 128, %s261, %s249
        $region20: #{tpu_custom_call.1} parent=15 // pred_fallthru
          _
        // Predicated region
        $region21: #{tpu_custom_call.1} parent=15 // pred_check
          %p264 = pneg %p90
        $region22: #{tpu_custom_call.1} parent=15 // pred_check_branch
          %266 = sbr.rel (%p264) target = $region24
        $region23: #{tpu_custom_call.1} parent=15 // pred_region
          %s267 = sand.u32 %s80, 1
          %s268 = scalar_lea.sflag [#allocation6], %s267
          %s269 = sand.u32 %s80, 1
          %s270 = smul.addr %s269, 8
          %s271 = scalar_lea.vmem [#allocation5], %s270
          %s272 = sadd.s32 %s35, %s36
          %s274 = ssub.s32 128, 128
          %275 = vsyncadd %s268, %s274
          %s276 = smul.addr %s272, 128
          %s277 = scalar_lea.hbm %s1, %s276
          %s279 = sshll.u32 %s271, 4
          %s280 = int_to_ptr.vmem [resolvable:$true] %s279
          %282 = dma.hbm_to_vmem [thread:$0]  %s277, 128, %s280, %s268
        $region24: #{tpu_custom_call.1} parent=15 // pred_fallthru
          _
      $region16: #{tpu_custom_call.1} parent=5 // pred_fallthru
        _
      %p283 = scmp.le.s32.totalorder 1, %s28
      %p284 = scmp.lt.s32.totalorder %s28, 3
      %p285 = pnand %p283, %p284
      %p286 = pneg %p285
      // Predicated region
      $region25: #{tpu_custom_call.1} parent=5 // pred_check
        _
      $region26: #{tpu_custom_call.1} parent=5 // pred_check_branch
        %288 = sbr.rel (%p285) target = $region28
      $region27: #{tpu_custom_call.1} parent=5 // pred_region
        %s289 = ssub.s32 %s28, 1
        %s290 = sand.u32 %s55, 1
        %s291 = scalar_lea.sflag [#allocation3], %s290
        %s292 = sand.u32 %s55, 1
        %s293 = smul.addr %s292, 8
        %s294 = scalar_lea.vmem [#allocation2], %s293
        // Predicated region
        $region29: #{tpu_custom_call.1} parent=27 // pred_check
          %p295 = pneg %p68
        $region30: #{tpu_custom_call.1} parent=27 // pred_check_branch
          %297 = sbr.rel (%p295) target = $region32
        $region31: #{tpu_custom_call.1} parent=27 // pred_region
          %298 = dma.done %s291, 128
        $region32: #{tpu_custom_call.1} parent=27 // pred_fallthru
          _
        %s299 = sand.u32 %s83, 1
        %s300 = scalar_lea.sflag [#allocation6], %s299
        %s301 = sand.u32 %s83, 1
        %s302 = smul.addr %s301, 8
        %s303 = scalar_lea.vmem [#allocation5], %s302
        // Predicated region
        $region33: #{tpu_custom_call.1} parent=27 // pred_check
          %p304 = pneg %p96
        $region34: #{tpu_custom_call.1} parent=27 // pred_check_branch
          %306 = sbr.rel (%p304) target = $region36
        $region35: #{tpu_custom_call.1} parent=27 // pred_region
          %307 = dma.done %s300, 128
        $region36: #{tpu_custom_call.1} parent=27 // pred_fallthru
          _
        %s308 = sand.u32 %s55, 1
        %s309 = scalar_lea.sflag [#allocation3], %s308
        %s310 = sand.u32 %s55, 1
        %s311 = smul.addr %s310, 8
        %s312 = scalar_lea.vmem [#allocation2], %s311
        %p313 = pneg %p68
        %p314 = pneg %p65
        %s315 = sand.u32 %s83, 1
        %s316 = scalar_lea.sflag [#allocation6], %s315
        %s317 = sand.u32 %s83, 1
        %s318 = smul.addr %s317, 8
        %s319 = scalar_lea.vmem [#allocation5], %s318
        %p320 = pneg %p96
        %p321 = pneg %p93
        %p322 = pneg %p122
        %p323 = pneg %p119
        %s324 = sand.u32 %s109, 1
        %s325 = scalar_lea.sflag [#allocation4], %s324
        %s326 = sand.u32 %s109, 1
        %s327 = smul.addr %s326, 8
        %s328 = scalar_lea.vmem [#allocation7], %s327
        %p329 = pneg %p148
        %p330 = pneg %p145
        %s331 = sand.u32 %s33, 1
        %s332 = scalar_lea.sflag [#allocation9], %s331
        %s333 = sand.u32 %s135, 1
        %s334 = smul.addr %s333, 8
        %s335 = scalar_lea.vmem [#allocation8], %s334
        %p336 = pneg %p174
        %p337 = pneg %p171
        %s338 = sand.u32 %s33, 1
        %s339 = scalar_lea.sflag [#allocation9], %s338
        %s340 = sand.u32 %s161, 1
        %s341 = smul.addr %s340, 8
        %s342 = scalar_lea.vmem [#allocation10], %s341
        %p343 = pneg %p200
        %p344 = pneg %p197
        %s345 = sand.u32 %s33, 1
        %s346 = scalar_lea.sflag [#allocation12], %s345
        %s347 = sand.u32 %s187, 1
        %s348 = smul.addr %s347, 128
        %s349 = scalar_lea.vmem [#allocation11], %s348
        %p350 = pneg %p226
        %p351 = pneg %p223
        %s352 = sand.u32 %s33, 1
        %s353 = scalar_lea.sflag [#allocation12], %s352
        %s354 = sand.u32 %s213, 1
        %s355 = smul.addr %s354, 128
        %s356 = scalar_lea.vmem [#allocation13], %s355
        %s357 = sadd.s32 %s37, %s38
        %s358 = sadd.s32 %s37, %s38
        %p359 = scmp.eq.s32.totalorder %s38, 0
        // Predicated region
        $region37: #{tpu_custom_call.1} parent=27 // pred_check
          %p360 = pneg %p359
        $region38: #{tpu_custom_call.1} parent=27 // pred_check_branch
          %362 = sbr.rel (%p360) target = $region40
        $region39: #{tpu_custom_call.1} parent=27 // pred_region
          %363 = vst [vmem:[%s328] sm:$0xff] 0.0
          %364 = vst [vmem:[%s335] sm:$0xff] 0.0
          %365 = vst [vmem:[%s342] sm:$0xff] 0.0
          %366 = vst [vmem:[%s349] sm:$0xff] 0.0
          %367 = vst [vmem:[%s349 + $0x8] sm:$0xff] 0.0
          %368 = vst [vmem:[%s349 + $0x10] sm:$0xff] 0.0
          %369 = vst [vmem:[%s349 + $0x18] sm:$0xff] 0.0
          %370 = vst [vmem:[%s349 + $0x20] sm:$0xff] 0.0
          %371 = vst [vmem:[%s349 + $0x28] sm:$0xff] 0.0
          %372 = vst [vmem:[%s349 + $0x30] sm:$0xff] 0.0
          %373 = vst [vmem:[%s349 + $0x38] sm:$0xff] 0.0
          %374 = vst [vmem:[%s349 + $0x40] sm:$0xff] 0.0
          %375 = vst [vmem:[%s349 + $0x48] sm:$0xff] 0.0
          %376 = vst [vmem:[%s349 + $0x50] sm:$0xff] 0.0
          %377 = vst [vmem:[%s349 + $0x58] sm:$0xff] 0.0
          %378 = vst [vmem:[%s349 + $0x60] sm:$0xff] 0.0
          %379 = vst [vmem:[%s349 + $0x68] sm:$0xff] 0.0
          %380 = vst [vmem:[%s349 + $0x70] sm:$0xff] 0.0
          %381 = vst [vmem:[%s349 + $0x78] sm:$0xff] 0.0
          %382 = vst [vmem:[%s356] sm:$0xff] 0.0
          %383 = vst [vmem:[%s356 + $0x8] sm:$0xff] 0.0
          %384 = vst [vmem:[%s356 + $0x10] sm:$0xff] 0.0
          %385 = vst [vmem:[%s356 + $0x18] sm:$0xff] 0.0
          %386 = vst [vmem:[%s356 + $0x20] sm:$0xff] 0.0
          %387 = vst [vmem:[%s356 + $0x28] sm:$0xff] 0.0
          %388 = vst [vmem:[%s356 + $0x30] sm:$0xff] 0.0
          %389 = vst [vmem:[%s356 + $0x38] sm:$0xff] 0.0
          %390 = vst [vmem:[%s356 + $0x40] sm:$0xff] 0.0
          %391 = vst [vmem:[%s356 + $0x48] sm:$0xff] 0.0
          %392 = vst [vmem:[%s356 + $0x50] sm:$0xff] 0.0
          %393 = vst [vmem:[%s356 + $0x58] sm:$0xff] 0.0
          %394 = vst [vmem:[%s356 + $0x60] sm:$0xff] 0.0
          %395 = vst [vmem:[%s356 + $0x68] sm:$0xff] 0.0
          %396 = vst [vmem:[%s356 + $0x70] sm:$0xff] 0.0
          %397 = vst [vmem:[%s356 + $0x78] sm:$0xff] 0.0
        $region40: #{tpu_custom_call.1} parent=27 // pred_fallthru
          _
        %v398 = vld [vmem:[%s294] sm:$0xff]
        %v399 = vmax.f32 %v398, -10.0
        %v400 = vmin.f32 %v399, 10.0
        %v401 = vld [vmem:[%s303] sm:$0xff]
        %v402 = vmax.f32 %v401, -10.0
        %v403 = vmin.f32 %v402, 10.0
        %v404 = vsub.f32 %v400, %v403
        %v405 = vld [vmem:[%s328] sm:$0xff]
        %v406 = vmul.f32 %v404, %v404
        %v407 = vadd.f32 %v406, 0.0
        %v408 = vadd.f32 %v405, %v407
        %409 = vst [vmem:[%s328] sm:$0xff] %v408
        %v410 = vld [vmem:[%s335] sm:$0xff]
        %v411 = vadd.f32 %v403, 0.0
        %v412 = vadd.f32 %v410, %v411
        %413 = vst [vmem:[%s335] sm:$0xff] %v412
        %v414 = vld [vmem:[%s342] sm:$0xff]
        %v415 = vadd.f32 %v400, 0.0
        %v416 = vadd.f32 %v414, %v415
        %417 = vst [vmem:[%s342] sm:$0xff] %v416
        %v418 = vld [vmem:[%s349] sm:$0xff]
        %v419 = vld [vmem:[%s349 + $0x8] sm:$0xff]
        %v420 = vld [vmem:[%s349 + $0x10] sm:$0xff]
        %v421 = vld [vmem:[%s349 + $0x18] sm:$0xff]
        %v422 = vld [vmem:[%s349 + $0x20] sm:$0xff]
        %v423 = vld [vmem:[%s349 + $0x28] sm:$0xff]
        %v424 = vld [vmem:[%s349 + $0x30] sm:$0xff]
        %v425 = vld [vmem:[%s349 + $0x38] sm:$0xff]
        %v426 = vld [vmem:[%s349 + $0x40] sm:$0xff]
        %v427 = vld [vmem:[%s349 + $0x48] sm:$0xff]
        %v428 = vld [vmem:[%s349 + $0x50] sm:$0xff]
        %v429 = vld [vmem:[%s349 + $0x58] sm:$0xff]
        %v430 = vld [vmem:[%s349 + $0x60] sm:$0xff]
        %v431 = vld [vmem:[%s349 + $0x68] sm:$0xff]
        %v432 = vld [vmem:[%s349 + $0x70] sm:$0xff]
        %v433 = vld [vmem:[%s349 + $0x78] sm:$0xff]
        %434 = vxpose.xlu0.b32.start [1/16] %v403, 128
        %435 = vxpose.xlu0.b32.cont [2/16] 0.0, 128
        %436 = vxpose.xlu0.b32.cont [3/16] 0.0, 128
        %437 = vxpose.xlu0.b32.cont [4/16] 0.0, 128
        %438 = vxpose.xlu0.b32.cont [5/16] 0.0, 128
        %439 = vxpose.xlu0.b32.cont [6/16] 0.0, 128
        %440 = vxpose.xlu0.b32.cont [7/16] 0.0, 128
        %441 = vxpose.xlu0.b32.cont [8/16] 0.0, 128
        %442 = vxpose.xlu0.b32.cont [9/16] 0.0, 128
        %443 = vxpose.xlu0.b32.cont [10/16] 0.0, 128
        %444 = vxpose.xlu0.b32.cont [11/16] 0.0, 128
        %445 = vxpose.xlu0.b32.cont [12/16] 0.0, 128
        %446 = vxpose.xlu0.b32.cont [13/16] 0.0, 128
        %447 = vxpose.xlu0.b32.cont [14/16] 0.0, 128
        %448 = vxpose.xlu0.b32.cont [15/16] 0.0, 128
        %449 = vxpose.xlu0.b32.end [16/16] 0.0, 128
        %v450 = vpop.trf.xlu0
        %v451 = vpop.trf.xlu0
        %v452 = vpop.trf.xlu0
        %v453 = vpop.trf.xlu0
        %v454 = vpop.trf.xlu0
        %v455 = vpop.trf.xlu0
        %v456 = vpop.trf.xlu0
        %v457 = vpop.trf.xlu0
        %v458 = vpop.trf.xlu0
        %v459 = vpop.trf.xlu0
        %v460 = vpop.trf.xlu0
        %v461 = vpop.trf.xlu0
        %v462 = vpop.trf.xlu0
        %v463 = vpop.trf.xlu0
        %v464 = vpop.trf.xlu0
        %v465 = vpop.trf.xlu0
        %vm466 = vcmask 64512
        %v468 = vsel %vm466, %v450, 0
        %v471 = vsel %vm466, %v451, 0
        %v474 = vsel %vm466, %v452, 0
        %v477 = vsel %vm466, %v453, 0
        %v480 = vsel %vm466, %v454, 0
        %v483 = vsel %vm466, %v455, 0
        %v486 = vsel %vm466, %v456, 0
        %v489 = vsel %vm466, %v457, 0
        %v492 = vsel %vm466, %v458, 0
        %v495 = vsel %vm466, %v459, 0
        %v498 = vsel %vm466, %v460, 0
        %v501 = vsel %vm466, %v461, 0
        %v504 = vsel %vm466, %v462, 0
        %v507 = vsel %vm466, %v463, 0
        %v510 = vsel %vm466, %v464, 0
        %v513 = vsel %vm466, %v465, 0
        %515 = vmatprep.subr.mxu0 0.0
        %516 = vmatpush1.msra.mxu0 0.0
        %517 = vmatprep.subr.mxu0 0.0
        %518 = vmatpush1.msra.mxu0 0.0
        %519 = vmatprep.subr.mxu0 0.0
        %520 = vmatpush1.msra.mxu0 0.0
        %521 = vmatprep.subr.mxu0 0.0
        %522 = vmatpush1.msra.mxu0 0.0
        %523 = vmatprep.subr.mxu0 0.0
        %524 = vmatpush1.msra.mxu0 0.0
        %525 = vmatprep.subr.mxu0 0.0
        %526 = vmatpush1.msra.mxu0 0.0
        %527 = vmatprep.subr.mxu0 0.0
        %528 = vmatpush1.msra.mxu0 0.0
        %529 = vmatprep.subr.mxu0 0.0
        %530 = vmatpush1.msra.mxu0 0.0
        %531 = vmatprep.subr.mxu0 0.0
        %532 = vmatpush1.msra.mxu0 0.0
        %533 = vmatprep.subr.mxu0 0.0
        %534 = vmatpush1.msra.mxu0 0.0
        %535 = vmatprep.subr.mxu0 0.0
        %536 = vmatpush1.msra.mxu0 0.0
        %537 = vmatprep.subr.mxu0 0.0
        %538 = vmatpush1.msra.mxu0 0.0
        %539 = vmatprep.subr.mxu0 0.0
        %540 = vmatpush1.msra.mxu0 0.0
        %541 = vmatprep.subr.mxu0 0.0
        %542 = vmatpush1.msra.mxu0 0.0
        %543 = vmatprep.subr.mxu0 0.0
        %544 = vmatpush1.msra.mxu0 0.0
        %545 = vmatprep.subr.mxu0 0.0
        %546 = vmatpush1.msra.mxu0 %v403
        %547 = vmatprep.subr.mxu0 0.0
        %548 = vmatpush2.msra.mxu0 0.0
        %549 = vmatprep.subr.mxu0 0.0
        %550 = vmatpush2.msra.mxu0 0.0
        %551 = vmatprep.subr.mxu0 0.0
        %552 = vmatpush2.msra.mxu0 0.0
        %553 = vmatprep.subr.mxu0 0.0
        %554 = vmatpush2.msra.mxu0 0.0
        %555 = vmatprep.subr.mxu0 0.0
        %556 = vmatpush2.msra.mxu0 0.0
        %557 = vmatprep.subr.mxu0 0.0
        %558 = vmatpush2.msra.mxu0 0.0
        %559 = vmatprep.subr.mxu0 0.0
        %560 = vmatpush2.msra.mxu0 0.0
        %561 = vmatprep.subr.mxu0 0.0
        %562 = vmatpush2.msra.mxu0 0.0
        %563 = vmatprep.subr.mxu0 0.0
        %564 = vmatpush2.msra.mxu0 0.0
        %565 = vmatprep.subr.mxu0 0.0
        %566 = vmatpush2.msra.mxu0 0.0
        %567 = vmatprep.subr.mxu0 0.0
        %568 = vmatpush2.msra.mxu0 0.0
        %569 = vmatprep.subr.mxu0 0.0
        %570 = vmatpush2.msra.mxu0 0.0
        %571 = vmatprep.subr.mxu0 0.0
        %572 = vmatpush2.msra.mxu0 0.0
        %573 = vmatprep.subr.mxu0 0.0
        %574 = vmatpush2.msra.mxu0 0.0
        %575 = vmatprep.subr.mxu0 0.0
        %576 = vmatpush2.msra.mxu0 0.0
        %577 = vmatprep.subr.mxu0 0.0
        %578 = vmatpush2.msra.mxu0 0.0
        %579 = vmatprep.mubr.f32.mxu0 0.0
        %580 = vmatmul.mubr.f32.gmra.mxu0 %v468
        %v581 = vpop.f32.mrf.mxu0
        %v582 = vadd.f32 0.0, %v581
        %v583 = vpop.f32.mrf.mxu0
        %584 = vmatprep.mubr.f32.mxu0 0.0
        %585 = vmatmul.mubr.f32.gmra.mxu0 %v471
        %v586 = vpop.f32.mrf.mxu0
        %v587 = vadd.f32 0.0, %v586
        %v588 = vpop.f32.mrf.mxu0
        %589 = vmatprep.mubr.f32.mxu0 0.0
        %590 = vmatmul.mubr.f32.gmra.mxu0 %v474
        %v591 = vpop.f32.mrf.mxu0
        %v592 = vadd.f32 0.0, %v591
        %v593 = vpop.f32.mrf.mxu0
        %594 = vmatprep.mubr.f32.mxu0 0.0
        %595 = vmatmul.mubr.f32.gmra.mxu0 %v477
        %v596 = vpop.f32.mrf.mxu0
        %v597 = vadd.f32 0.0, %v596
        %v598 = vpop.f32.mrf.mxu0
        %599 = vmatprep.mubr.f32.mxu0 0.0
        %600 = vmatmul.mubr.f32.gmra.mxu0 %v480
        %v601 = vpop.f32.mrf.mxu0
        %v602 = vadd.f32 0.0, %v601
        %v603 = vpop.f32.mrf.mxu0
        %604 = vmatprep.mubr.f32.mxu0 0.0
        %605 = vmatmul.mubr.f32.gmra.mxu0 %v483
        %v606 = vpop.f32.mrf.mxu0
        %v607 = vadd.f32 0.0, %v606
        %v608 = vpop.f32.mrf.mxu0
        %609 = vmatprep.mubr.f32.mxu0 0.0
        %610 = vmatmul.mubr.f32.gmra.mxu0 %v486
        %v611 = vpop.f32.mrf.mxu0
        %v612 = vadd.f32 0.0, %v611
        %v613 = vpop.f32.mrf.mxu0
        %614 = vmatprep.mubr.f32.mxu0 0.0
        %615 = vmatmul.mubr.f32.gmra.mxu0 %v489
        %v616 = vpop.f32.mrf.mxu0
        %v617 = vadd.f32 0.0, %v616
        %v618 = vpop.f32.mrf.mxu0
        %619 = vmatprep.mubr.f32.mxu0 0.0
        %620 = vmatmul.mubr.f32.gmra.mxu0 %v492
        %v621 = vpop.f32.mrf.mxu0
        %v622 = vadd.f32 0.0, %v621
        %v623 = vpop.f32.mrf.mxu0
        %624 = vmatprep.mubr.f32.mxu0 0.0
        %625 = vmatmul.mubr.f32.gmra.mxu0 %v495
        %v626 = vpop.f32.mrf.mxu0
        %v627 = vadd.f32 0.0, %v626
        %v628 = vpop.f32.mrf.mxu0
        %629 = vmatprep.mubr.f32.mxu0 0.0
        %630 = vmatmul.mubr.f32.gmra.mxu0 %v498
        %v631 = vpop.f32.mrf.mxu0
        %v632 = vadd.f32 0.0, %v631
        %v633 = vpop.f32.mrf.mxu0
        %634 = vmatprep.mubr.f32.mxu0 0.0
        %635 = vmatmul.mubr.f32.gmra.mxu0 %v501
        %v636 = vpop.f32.mrf.mxu0
        %v637 = vadd.f32 0.0, %v636
        %v638 = vpop.f32.mrf.mxu0
        %639 = vmatprep.mubr.f32.mxu0 0.0
        %640 = vmatmul.mubr.f32.gmra.mxu0 %v504
        %v641 = vpop.f32.mrf.mxu0
        %v642 = vadd.f32 0.0, %v641
        %v643 = vpop.f32.mrf.mxu0
        %644 = vmatprep.mubr.f32.mxu0 0.0
        %645 = vmatmul.mubr.f32.gmra.mxu0 %v507
        %v646 = vpop.f32.mrf.mxu0
        %v647 = vadd.f32 0.0, %v646
        %v648 = vpop.f32.mrf.mxu0
        %649 = vmatprep.mubr.f32.mxu0 0.0
        %650 = vmatmul.mubr.f32.gmra.mxu0 %v510
        %v651 = vpop.f32.mrf.mxu0
        %v652 = vadd.f32 0.0, %v651
        %v653 = vpop.f32.mrf.mxu0
        %654 = vmatprep.mubr.f32.mxu0 0.0
        %655 = vmatmul.mubr.f32.gmra.mxu0 %v513
        %v656 = vpop.f32.mrf.mxu0
        %v657 = vadd.f32 0.0, %v656
        %v658 = vpop.f32.mrf.mxu0
        %659 = vdwg.mxu0
        %v660 = vadd.f32 %v418, %v582
        %v661 = vadd.f32 %v419, %v587
        %v662 = vadd.f32 %v420, %v592
        %v663 = vadd.f32 %v421, %v597
        %v664 = vadd.f32 %v422, %v602
        %v665 = vadd.f32 %v423, %v607
        %v666 = vadd.f32 %v424, %v612
        %v667 = vadd.f32 %v425, %v617
        %v668 = vadd.f32 %v426, %v622
        %v669 = vadd.f32 %v427, %v627
        %v670 = vadd.f32 %v428, %v632
        %v671 = vadd.f32 %v429, %v637
        %v672 = vadd.f32 %v430, %v642
        %v673 = vadd.f32 %v431, %v647
        %v674 = vadd.f32 %v432, %v652
        %v675 = vadd.f32 %v433, %v657
        %676 = vst [vmem:[%s349] sm:$0xff] %v660
        %677 = vst [vmem:[%s349 + $0x8] sm:$0xff] %v661
        %678 = vst [vmem:[%s349 + $0x10] sm:$0xff] %v662
        %679 = vst [vmem:[%s349 + $0x18] sm:$0xff] %v663
        %680 = vst [vmem:[%s349 + $0x20] sm:$0xff] %v664
        %681 = vst [vmem:[%s349 + $0x28] sm:$0xff] %v665
        %682 = vst [vmem:[%s349 + $0x30] sm:$0xff] %v666
        %683 = vst [vmem:[%s349 + $0x38] sm:$0xff] %v667
        %684 = vst [vmem:[%s349 + $0x40] sm:$0xff] %v668
        %685 = vst [vmem:[%s349 + $0x48] sm:$0xff] %v669
        %686 = vst [vmem:[%s349 + $0x50] sm:$0xff] %v670
        %687 = vst [vmem:[%s349 + $0x58] sm:$0xff] %v671
        %688 = vst [vmem:[%s349 + $0x60] sm:$0xff] %v672
        %689 = vst [vmem:[%s349 + $0x68] sm:$0xff] %v673
        %690 = vst [vmem:[%s349 + $0x70] sm:$0xff] %v674
        %691 = vst [vmem:[%s349 + $0x78] sm:$0xff] %v675
        %v692 = vld [vmem:[%s356] sm:$0xff]
        %v693 = vld [vmem:[%s356 + $0x8] sm:$0xff]
        %v694 = vld [vmem:[%s356 + $0x10] sm:$0xff]
        %v695 = vld [vmem:[%s356 + $0x18] sm:$0xff]
        %v696 = vld [vmem:[%s356 + $0x20] sm:$0xff]
        %v697 = vld [vmem:[%s356 + $0x28] sm:$0xff]
        %v698 = vld [vmem:[%s356 + $0x30] sm:$0xff]
        %v699 = vld [vmem:[%s356 + $0x38] sm:$0xff]
        %v700 = vld [vmem:[%s356 + $0x40] sm:$0xff]
        %v701 = vld [vmem:[%s356 + $0x48] sm:$0xff]
        %v702 = vld [vmem:[%s356 + $0x50] sm:$0xff]
        %v703 = vld [vmem:[%s356 + $0x58] sm:$0xff]
        %v704 = vld [vmem:[%s356 + $0x60] sm:$0xff]
        %v705 = vld [vmem:[%s356 + $0x68] sm:$0xff]
        %v706 = vld [vmem:[%s356 + $0x70] sm:$0xff]
        %v707 = vld [vmem:[%s356 + $0x78] sm:$0xff]
        %708 = vxpose.xlu0.b32.start [1/16] %v400, 128
        %709 = vxpose.xlu0.b32.cont [2/16] 0.0, 128
        %710 = vxpose.xlu0.b32.cont [3/16] 0.0, 128
        %711 = vxpose.xlu0.b32.cont [4/16] 0.0, 128
        %712 = vxpose.xlu0.b32.cont [5/16] 0.0, 128
        %713 = vxpose.xlu0.b32.cont [6/16] 0.0, 128
        %714 = vxpose.xlu0.b32.cont [7/16] 0.0, 128
        %715 = vxpose.xlu0.b32.cont [8/16] 0.0, 128
        %716 = vxpose.xlu0.b32.cont [9/16] 0.0, 128
        %717 = vxpose.xlu0.b32.cont [10/16] 0.0, 128
        %718 = vxpose.xlu0.b32.cont [11/16] 0.0, 128
        %719 = vxpose.xlu0.b32.cont [12/16] 0.0, 128
        %720 = vxpose.xlu0.b32.cont [13/16] 0.0, 128
        %721 = vxpose.xlu0.b32.cont [14/16] 0.0, 128
        %722 = vxpose.xlu0.b32.cont [15/16] 0.0, 128
        %723 = vxpose.xlu0.b32.end [16/16] 0.0, 128
        %v724 = vpop.trf.xlu0
        %v725 = vpop.trf.xlu0
        %v726 = vpop.trf.xlu0
        %v727 = vpop.trf.xlu0
        %v728 = vpop.trf.xlu0
        %v729 = vpop.trf.xlu0
        %v730 = vpop.trf.xlu0
        %v731 = vpop.trf.xlu0
        %v732 = vpop.trf.xlu0
        %v733 = vpop.trf.xlu0
        %v734 = vpop.trf.xlu0
        %v735 = vpop.trf.xlu0
        %v736 = vpop.trf.xlu0
        %v737 = vpop.trf.xlu0
        %v738 = vpop.trf.xlu0
        %v739 = vpop.trf.xlu0
        %v741 = vsel %vm466, %v724, 0
        %v744 = vsel %vm466, %v725, 0
        %v747 = vsel %vm466, %v726, 0
        %v750 = vsel %vm466, %v727, 0
        %v753 = vsel %vm466, %v728, 0
        %v756 = vsel %vm466, %v729, 0
        %v759 = vsel %vm466, %v730, 0
        %v762 = vsel %vm466, %v731, 0
        %v765 = vsel %vm466, %v732, 0
        %v768 = vsel %vm466, %v733, 0
        %v771 = vsel %vm466, %v734, 0
        %v774 = vsel %vm466, %v735, 0
        %v777 = vsel %vm466, %v736, 0
        %v780 = vsel %vm466, %v737, 0
        %v783 = vsel %vm466, %v738, 0
        %v786 = vsel %vm466, %v739, 0
        %788 = vmatprep.subr.mxu0 0.0
        %789 = vmatpush1.msra.mxu0 0.0
        %790 = vmatprep.subr.mxu0 0.0
        %791 = vmatpush1.msra.mxu0 0.0
        %792 = vmatprep.subr.mxu0 0.0
        %793 = vmatpush1.msra.mxu0 0.0
        %794 = vmatprep.subr.mxu0 0.0
        %795 = vmatpush1.msra.mxu0 0.0
        %796 = vmatprep.subr.mxu0 0.0
        %797 = vmatpush1.msra.mxu0 0.0
        %798 = vmatprep.subr.mxu0 0.0
        %799 = vmatpush1.msra.mxu0 0.0
        %800 = vmatprep.subr.mxu0 0.0
        %801 = vmatpush1.msra.mxu0 0.0
        %802 = vmatprep.subr.mxu0 0.0
        %803 = vmatpush1.msra.mxu0 0.0
        %804 = vmatprep.subr.mxu0 0.0
        %805 = vmatpush1.msra.mxu0 0.0
        %806 = vmatprep.subr.mxu0 0.0
        %807 = vmatpush1.msra.mxu0 0.0
        %808 = vmatprep.subr.mxu0 0.0
        %809 = vmatpush1.msra.mxu0 0.0
        %810 = vmatprep.subr.mxu0 0.0
        %811 = vmatpush1.msra.mxu0 0.0
        %812 = vmatprep.subr.mxu0 0.0
        %813 = vmatpush1.msra.mxu0 0.0
        %814 = vmatprep.subr.mxu0 0.0
        %815 = vmatpush1.msra.mxu0 0.0
        %816 = vmatprep.subr.mxu0 0.0
        %817 = vmatpush1.msra.mxu0 0.0
        %818 = vmatprep.subr.mxu0 0.0
        %819 = vmatpush1.msra.mxu0 %v400
        %820 = vmatprep.subr.mxu0 0.0
        %821 = vmatpush2.msra.mxu0 0.0
        %822 = vmatprep.subr.mxu0 0.0
        %823 = vmatpush2.msra.mxu0 0.0
        %824 = vmatprep.subr.mxu0 0.0
        %825 = vmatpush2.msra.mxu0 0.0
        %826 = vmatprep.subr.mxu0 0.0
        %827 = vmatpush2.msra.mxu0 0.0
        %828 = vmatprep.subr.mxu0 0.0
        %829 = vmatpush2.msra.mxu0 0.0
        %830 = vmatprep.subr.mxu0 0.0
        %831 = vmatpush2.msra.mxu0 0.0
        %832 = vmatprep.subr.mxu0 0.0
        %833 = vmatpush2.msra.mxu0 0.0
        %834 = vmatprep.subr.mxu0 0.0
        %835 = vmatpush2.msra.mxu0 0.0
        %836 = vmatprep.subr.mxu0 0.0
        %837 = vmatpush2.msra.mxu0 0.0
        %838 = vmatprep.subr.mxu0 0.0
        %839 = vmatpush2.msra.mxu0 0.0
        %840 = vmatprep.subr.mxu0 0.0
        %841 = vmatpush2.msra.mxu0 0.0
        %842 = vmatprep.subr.mxu0 0.0
        %843 = vmatpush2.msra.mxu0 0.0
        %844 = vmatprep.subr.mxu0 0.0
        %845 = vmatpush2.msra.mxu0 0.0
        %846 = vmatprep.subr.mxu0 0.0
        %847 = vmatpush2.msra.mxu0 0.0
        %848 = vmatprep.subr.mxu0 0.0
        %849 = vmatpush2.msra.mxu0 0.0
        %850 = vmatprep.subr.mxu0 0.0
        %851 = vmatpush2.msra.mxu0 0.0
        %852 = vmatprep.mubr.f32.mxu0 0.0
        %853 = vmatmul.mubr.f32.gmra.mxu0 %v741
        %v854 = vpop.f32.mrf.mxu0
        %v855 = vadd.f32 0.0, %v854
        %v856 = vpop.f32.mrf.mxu0
        %857 = vmatprep.mubr.f32.mxu0 0.0
        %858 = vmatmul.mubr.f32.gmra.mxu0 %v744
        %v859 = vpop.f32.mrf.mxu0
        %v860 = vadd.f32 0.0, %v859
        %v861 = vpop.f32.mrf.mxu0
        %862 = vmatprep.mubr.f32.mxu0 0.0
        %863 = vmatmul.mubr.f32.gmra.mxu0 %v747
        %v864 = vpop.f32.mrf.mxu0
        %v865 = vadd.f32 0.0, %v864
        %v866 = vpop.f32.mrf.mxu0
        %867 = vmatprep.mubr.f32.mxu0 0.0
        %868 = vmatmul.mubr.f32.gmra.mxu0 %v750
        %v869 = vpop.f32.mrf.mxu0
        %v870 = vadd.f32 0.0, %v869
        %v871 = vpop.f32.mrf.mxu0
        %872 = vmatprep.mubr.f32.mxu0 0.0
        %873 = vmatmul.mubr.f32.gmra.mxu0 %v753
        %v874 = vpop.f32.mrf.mxu0
        %v875 = vadd.f32 0.0, %v874
        %v876 = vpop.f32.mrf.mxu0
        %877 = vmatprep.mubr.f32.mxu0 0.0
        %878 = vmatmul.mubr.f32.gmra.mxu0 %v756
        %v879 = vpop.f32.mrf.mxu0
        %v880 = vadd.f32 0.0, %v879
        %v881 = vpop.f32.mrf.mxu0
        %882 = vmatprep.mubr.f32.mxu0 0.0
        %883 = vmatmul.mubr.f32.gmra.mxu0 %v759
        %v884 = vpop.f32.mrf.mxu0
        %v885 = vadd.f32 0.0, %v884
        %v886 = vpop.f32.mrf.mxu0
        %887 = vmatprep.mubr.f32.mxu0 0.0
        %888 = vmatmul.mubr.f32.gmra.mxu0 %v762
        %v889 = vpop.f32.mrf.mxu0
        %v890 = vadd.f32 0.0, %v889
        %v891 = vpop.f32.mrf.mxu0
        %892 = vmatprep.mubr.f32.mxu0 0.0
        %893 = vmatmul.mubr.f32.gmra.mxu0 %v765
        %v894 = vpop.f32.mrf.mxu0
        %v895 = vadd.f32 0.0, %v894
        %v896 = vpop.f32.mrf.mxu0
        %897 = vmatprep.mubr.f32.mxu0 0.0
        %898 = vmatmul.mubr.f32.gmra.mxu0 %v768
        %v899 = vpop.f32.mrf.mxu0
        %v900 = vadd.f32 0.0, %v899
        %v901 = vpop.f32.mrf.mxu0
        %902 = vmatprep.mubr.f32.mxu0 0.0
        %903 = vmatmul.mubr.f32.gmra.mxu0 %v771
        %v904 = vpop.f32.mrf.mxu0
        %v905 = vadd.f32 0.0, %v904
        %v906 = vpop.f32.mrf.mxu0
        %907 = vmatprep.mubr.f32.mxu0 0.0
        %908 = vmatmul.mubr.f32.gmra.mxu0 %v774
        %v909 = vpop.f32.mrf.mxu0
        %v910 = vadd.f32 0.0, %v909
        %v911 = vpop.f32.mrf.mxu0
        %912 = vmatprep.mubr.f32.mxu0 0.0
        %913 = vmatmul.mubr.f32.gmra.mxu0 %v777
        %v914 = vpop.f32.mrf.mxu0
        %v915 = vadd.f32 0.0, %v914
        %v916 = vpop.f32.mrf.mxu0
        %917 = vmatprep.mubr.f32.mxu0 0.0
        %918 = vmatmul.mubr.f32.gmra.mxu0 %v780
        %v919 = vpop.f32.mrf.mxu0
        %v920 = vadd.f32 0.0, %v919
        %v921 = vpop.f32.mrf.mxu0
        %922 = vmatprep.mubr.f32.mxu0 0.0
        %923 = vmatmul.mubr.f32.gmra.mxu0 %v783
        %v924 = vpop.f32.mrf.mxu0
        %v925 = vadd.f32 0.0, %v924
        %v926 = vpop.f32.mrf.mxu0
        %927 = vmatprep.mubr.f32.mxu0 0.0
        %928 = vmatmul.mubr.f32.gmra.mxu0 %v786
        %v929 = vpop.f32.mrf.mxu0
        %v930 = vadd.f32 0.0, %v929
        %v931 = vpop.f32.mrf.mxu0
        %932 = vdwg.mxu0
        %v933 = vadd.f32 %v692, %v855
        %v934 = vadd.f32 %v693, %v860
        %v935 = vadd.f32 %v694, %v865
        %v936 = vadd.f32 %v695, %v870
        %v937 = vadd.f32 %v696, %v875
        %v938 = vadd.f32 %v697, %v880
        %v939 = vadd.f32 %v698, %v885
        %v940 = vadd.f32 %v699, %v890
        %v941 = vadd.f32 %v700, %v895
        %v942 = vadd.f32 %v701, %v900
        %v943 = vadd.f32 %v702, %v905
        %v944 = vadd.f32 %v703, %v910
        %v945 = vadd.f32 %v704, %v915
        %v946 = vadd.f32 %v705, %v920
        %v947 = vadd.f32 %v706, %v925
        %v948 = vadd.f32 %v707, %v930
        %949 = vst [vmem:[%s356] sm:$0xff] %v933
        %950 = vst [vmem:[%s356 + $0x8] sm:$0xff] %v934
        %951 = vst [vmem:[%s356 + $0x10] sm:$0xff] %v935
        %952 = vst [vmem:[%s356 + $0x18] sm:$0xff] %v936
        %953 = vst [vmem:[%s356 + $0x20] sm:$0xff] %v937
        %954 = vst [vmem:[%s356 + $0x28] sm:$0xff] %v938
        %955 = vst [vmem:[%s356 + $0x30] sm:$0xff] %v939
        %956 = vst [vmem:[%s356 + $0x38] sm:$0xff] %v940
        %957 = vst [vmem:[%s356 + $0x40] sm:$0xff] %v941
        %958 = vst [vmem:[%s356 + $0x48] sm:$0xff] %v942
        %959 = vst [vmem:[%s356 + $0x50] sm:$0xff] %v943
        %960 = vst [vmem:[%s356 + $0x58] sm:$0xff] %v944
        %961 = vst [vmem:[%s356 + $0x60] sm:$0xff] %v945
        %962 = vst [vmem:[%s356 + $0x68] sm:$0xff] %v946
        %963 = vst [vmem:[%s356 + $0x70] sm:$0xff] %v947
        %964 = vst [vmem:[%s356 + $0x78] sm:$0xff] %v948
        %s965 = sand.u32 %s109, 1
        %s966 = scalar_lea.sflag [#allocation4], %s965
        %s967 = sand.u32 %s109, 1
        %s968 = smul.addr %s967, 8
        %s969 = scalar_lea.vmem [#allocation7], %s968
        %s970 = sand.u32 %s33, 1
        %s971 = scalar_lea.sflag [#allocation9], %s970
        %s972 = sand.u32 %s135, 1
        %s973 = smul.addr %s972, 8
        %s974 = scalar_lea.vmem [#allocation8], %s973
        %s975 = sand.u32 %s33, 1
        %s976 = scalar_lea.sflag [#allocation9], %s975
        %s977 = sand.u32 %s161, 1
        %s978 = smul.addr %s977, 8
        %s979 = scalar_lea.vmem [#allocation10], %s978
        %s980 = sand.u32 %s33, 1
        %s981 = scalar_lea.sflag [#allocation12], %s980
        %s982 = sand.u32 %s187, 1
        %s983 = smul.addr %s982, 128
        %s984 = scalar_lea.vmem [#allocation11], %s983
        %s985 = sand.u32 %s33, 1
        %s986 = scalar_lea.sflag [#allocation12], %s985
        %s987 = sand.u32 %s213, 1
        %s988 = smul.addr %s987, 128
        %s989 = scalar_lea.vmem [#allocation13], %s988
        // Predicated region
        $region41: #{tpu_custom_call.1} parent=27 // pred_check
          %p990 = pneg %p119
        $region42: #{tpu_custom_call.1} parent=27 // pred_check_branch
          %992 = sbr.rel (%p990) target = $region44
        $region43: #{tpu_custom_call.1} parent=27 // pred_region
          %s994 = ssub.s32 128, 128
          %995 = vsyncadd %s966, %s994
          %s996 = smul.addr %s37, 128
          %s997 = scalar_lea.hbm %s2, %s996
          %s999 = sshll.u32 %s969, 4
          %s1000 = int_to_ptr.vmem [resolvable:$true] %s999
          %1002 = dma.vmem_to_hbm [thread:$0]  %s1000, 128, %s997, %s966
        $region44: #{tpu_custom_call.1} parent=27 // pred_fallthru
          _
        // Predicated region
        $region45: #{tpu_custom_call.1} parent=27 // pred_check
          %p1003 = pneg %p145
        $region46: #{tpu_custom_call.1} parent=27 // pred_check_branch
          %1005 = sbr.rel (%p1003) target = $region48
        $region47: #{tpu_custom_call.1} parent=27 // pred_region
          %s1007 = ssub.s32 128, 128
          %1008 = vsyncadd %s971, %s1007
          %s1009 = smul.addr %s37, 128
          %s1010 = scalar_lea.hbm %s3, %s1009
          %s1012 = sshll.u32 %s974, 4
          %s1013 = int_to_ptr.vmem [resolvable:$true] %s1012
          %1015 = dma.vmem_to_hbm [thread:$0]  %s1013, 128, %s1010, %s971
        $region48: #{tpu_custom_call.1} parent=27 // pred_fallthru
          _
        // Predicated region
        $region49: #{tpu_custom_call.1} parent=27 // pred_check
          %p1016 = pneg %p171
        $region50: #{tpu_custom_call.1} parent=27 // pred_check_branch
          %1018 = sbr.rel (%p1016) target = $region52
        $region51: #{tpu_custom_call.1} parent=27 // pred_region
          %s1020 = ssub.s32 128, 128
          %1021 = vsyncadd %s976, %s1020
          %s1022 = smul.addr %s37, 128
          %s1023 = scalar_lea.hbm %s4, %s1022
          %s1025 = sshll.u32 %s979, 4
          %s1026 = int_to_ptr.vmem [resolvable:$true] %s1025
          %1028 = dma.vmem_to_hbm [thread:$0]  %s1026, 128, %s1023, %s976
        $region52: #{tpu_custom_call.1} parent=27 // pred_fallthru
          _
        // Predicated region
        $region53: #{tpu_custom_call.1} parent=27 // pred_check
          %p1029 = pneg %p197
        $region54: #{tpu_custom_call.1} parent=27 // pred_check_branch
          %1031 = sbr.rel (%p1029) target = $region56
        $region55: #{tpu_custom_call.1} parent=27 // pred_region
          %s1033 = ssub.s32 2048, 2048
          %1034 = vsyncadd %s981, %s1033
          %s1035 = smul.addr %s37, 16
          %s1036 = smul.addr %s1035, 128
          %s1037 = scalar_lea.hbm %s5, %s1036
          %s1038 = sshll.u32 %s984, 4
          %s1039 = int_to_ptr.vmem [resolvable:$true] %s1038
          %1044 = dma.vmem_to_hbm [thread:$0]  %s1039, 2048, %s1037, %s981, 128, 128, 8
        $region56: #{tpu_custom_call.1} parent=27 // pred_fallthru
          _
        // Predicated region
        $region57: #{tpu_custom_call.1} parent=27 // pred_check
          %p1045 = pneg %p223
        $region58: #{tpu_custom_call.1} parent=27 // pred_check_branch
          %1047 = sbr.rel (%p1045) target = $region60
        $region59: #{tpu_custom_call.1} parent=27 // pred_region
          %s1049 = ssub.s32 2048, 2048
          %1050 = vsyncadd %s986, %s1049
          %s1051 = smul.addr %s37, 16
          %s1052 = smul.addr %s1051, 128
          %s1053 = scalar_lea.hbm %s6, %s1052
          %s1054 = sshll.u32 %s989, 4
          %s1055 = int_to_ptr.vmem [resolvable:$true] %s1054
          %1060 = dma.vmem_to_hbm [thread:$0]  %s1055, 2048, %s1053, %s986, 128, 128, 8
        $region60: #{tpu_custom_call.1} parent=27 // pred_fallthru
          _
      $region28: #{tpu_custom_call.1} parent=5 // pred_fallthru
        _
      %p1061 = scmp.le.s32.totalorder 2, %s28
      // Predicated region
      $region61: #{tpu_custom_call.1} parent=5 // pred_check
        %p1062 = pneg %p1061
      $region62: #{tpu_custom_call.1} parent=5 // pred_check_branch
        %1064 = sbr.rel (%p1062) target = $region64
      $region63: #{tpu_custom_call.1} parent=5 // pred_region
        %s1065 = ssub.s32 %s28, 2
        // Predicated region
        $region65: #{tpu_custom_call.1} parent=63 // pred_check
          %p1066 = pneg %p125
        $region66: #{tpu_custom_call.1} parent=63 // pred_check_branch
          %1068 = sbr.rel (%p1066) target = $region68
        $region67: #{tpu_custom_call.1} parent=63 // pred_region
          %s1069 = sand.u32 %s110, 1
          %s1070 = scalar_lea.sflag [#allocation4], %s1069
          %s1071 = sand.u32 %s110, 1
          %s1072 = smul.addr %s1071, 8
          %s1073 = scalar_lea.vmem [#allocation7], %s1072
          %1074 = dma.done %s1070, 128
        $region68: #{tpu_custom_call.1} parent=63 // pred_fallthru
          _
        // Predicated region
        $region69: #{tpu_custom_call.1} parent=63 // pred_check
          %p1075 = pneg %p151
        $region70: #{tpu_custom_call.1} parent=63 // pred_check_branch
          %1077 = sbr.rel (%p1075) target = $region72
        $region71: #{tpu_custom_call.1} parent=63 // pred_region
          %s1078 = sand.u32 %s34, 1
          %s1079 = scalar_lea.sflag [#allocation9], %s1078
          %s1080 = sand.u32 %s136, 1
          %s1081 = smul.addr %s1080, 8
          %s1082 = scalar_lea.vmem [#allocation8], %s1081
          %1083 = dma.done %s1079, 128
        $region72: #{tpu_custom_call.1} parent=63 // pred_fallthru
          _
        // Predicated region
        $region73: #{tpu_custom_call.1} parent=63 // pred_check
          %p1084 = pneg %p177
        $region74: #{tpu_custom_call.1} parent=63 // pred_check_branch
          %1086 = sbr.rel (%p1084) target = $region76
        $region75: #{tpu_custom_call.1} parent=63 // pred_region
          %s1087 = sand.u32 %s34, 1
          %s1088 = scalar_lea.sflag [#allocation9], %s1087
          %s1089 = sand.u32 %s162, 1
          %s1090 = smul.addr %s1089, 8
          %s1091 = scalar_lea.vmem [#allocation10], %s1090
          %1092 = dma.done %s1088, 128
        $region76: #{tpu_custom_call.1} parent=63 // pred_fallthru
          _
        // Predicated region
        $region77: #{tpu_custom_call.1} parent=63 // pred_check
          %p1093 = pneg %p203
        $region78: #{tpu_custom_call.1} parent=63 // pred_check_branch
          %1095 = sbr.rel (%p1093) target = $region80
        $region79: #{tpu_custom_call.1} parent=63 // pred_region
          %s1096 = sand.u32 %s34, 1
          %s1097 = scalar_lea.sflag [#allocation12], %s1096
          %s1098 = sand.u32 %s188, 1
          %s1099 = smul.addr %s1098, 128
          %s1100 = scalar_lea.vmem [#allocation11], %s1099
          %1101 = dma.done %s1097, 2048
        $region80: #{tpu_custom_call.1} parent=63 // pred_fallthru
          _
        // Predicated region
        $region81: #{tpu_custom_call.1} parent=63 // pred_check
          %p1102 = pneg %p229
        $region82: #{tpu_custom_call.1} parent=63 // pred_check_branch
          %1104 = sbr.rel (%p1102) target = $region84
        $region83: #{tpu_custom_call.1} parent=63 // pred_region
          %s1105 = sand.u32 %s34, 1
          %s1106 = scalar_lea.sflag [#allocation12], %s1105
          %s1107 = sand.u32 %s214, 1
          %s1108 = smul.addr %s1107, 128
          %s1109 = scalar_lea.vmem [#allocation13], %s1108
          %1110 = dma.done %s1106, 2048
        $region84: #{tpu_custom_call.1} parent=63 // pred_fallthru
          _
      $region64: #{tpu_custom_call.1} parent=5 // pred_fallthru
        _
    $region6: #{tpu_custom_call.1} parent=1 // loop_footer
      %s32 = sadd.s32 1, %s28
    $region7: #{tpu_custom_call.1} parent=1 // loop_footer_branch
      %27 = sbr.rel target = $region3
    $region8: #{tpu_custom_call.1} parent=1 // loop_exit
      _
    %1111 = vsyncpa [#allocation3], 1
    %s1112 = scalar_lea.sflag [#allocation3], 1
    %1113 = vsyncpa %s1112, 1
    %1114 = vsyncpa [#allocation6], 1
    %s1115 = scalar_lea.sflag [#allocation6], 1
    %1116 = vsyncpa %s1115, 1
    %1117 = vsyncpa [#allocation4], 1
    %s1118 = scalar_lea.sflag [#allocation4], 1
    %1119 = vsyncpa %s1118, 1
    %1120 = vsyncpa [#allocation9], 1
    %s1121 = scalar_lea.sflag [#allocation9], 1
    %1122 = vsyncpa %s1121, 1
    %1123 = vsyncpa [#allocation12], 1
    %s1124 = scalar_lea.sflag [#allocation12], 1
    %1125 = vsyncpa %s1124, 1

</llo_original>
